<compile_context>
chip_gen: v6e
topology: v6e:2x2x1
jax: 0.10.0
libtpu: 0.0.40
codegen_flags: <defaults>
</compile_context>

<pallas_src>
import functools
import math

import jax
import jax.numpy as jnp
from jax.experimental import pallas as pl
from jax.experimental.pallas import tpu as pltpu

PAD_TOKEN = 0

_LANE = 128
_ISSUE_UNROLL = 8            # DMA descriptors issued per inner-loop iteration
_GATHER_UNROLL = 8           # rows gathered per inner-loop iteration (loop path)
_ONEHOT_MAX_VOCAB = 256      # one-hot matmul goes MXU-bound past ~V=256 on v5e
_MAX_TOKENS_PER_CALL = 1 << 16   # keep scalar-prefetched ids well inside SMEM


def _round_up(x, m):
    return ((x + m - 1) // m) * m


def _sublane_multiple(dtype):
    """Second-minor padding multiple (sub-32-bit dtypes pack along sublanes)."""
    itemsize = jnp.dtype(dtype).itemsize
    return 8 * max(1, 4 // itemsize)      # f32: 8, bf16: 16, int8/fp8: 32


def _tpu_vmem_config():
    """Returns (vmem_limit_bytes, default_tile_m), generation aware.

    v5e/v6e have 128 MiB VMEM per core -> large scoped limit + 512-row tiles.
    v7x has 64 MiB -> stay conservative (48 MiB, 256-row tiles).
    """
    try:
        cap = int(pltpu.get_tpu_info().vmem_capacity_bytes)
    except Exception:
        cap = 64 * 1024 * 1024
    limit = min(max(cap * 3 // 4, 32 * 1024 * 1024), 100 * 1024 * 1024)
    default_tile_m = 512 if cap >= 96 * 1024 * 1024 else 256
    return limit, default_tile_m


def _pick_tile(default_tile_m, n, per_row_bytes, budget_bytes, multiple=8):
    """Largest tile <= default that fits the per-path VMEM budget (and <= n)."""
    tm = min(default_tile_m, max(multiple, budget_bytes // max(per_row_bytes, 1)))
    tm = max(multiple, (tm // multiple) * multiple)
    tm = min(tm, max(multiple, _round_up(n, multiple)))
    return tm


# --------------------------------------------------------------------------
# Path 1: tiny vocab — VMEM-resident table, gather via one-hot matmul (MXU).
# --------------------------------------------------------------------------
def _onehot_kernel(ids_ref, table_ref, out_ref, *, scale):
    # ids_ref:   (TILE_M, 1) int32 token ids for this tile (VMEM)
    # table_ref: (V_pad, E_pad) whole embedding table, VMEM resident
    # out_ref:   (TILE_M, E_pad) scaled embeddings
    tile_m = out_ref.shape[0]
    v_pad = table_ref.shape[0]
    ids = ids_ref[...]                                              # (TILE_M, 1)
    vocab_iota = jax.lax.broadcasted_iota(jnp.int32, (tile_m, v_pad), 1)
    onehot = (vocab_iota == ids).astype(table_ref.dtype)            # (TILE_M, V_pad)
    gathered = jnp.dot(onehot, table_ref[...],
                       preferred_element_type=jnp.float32)          # (TILE_M, E_pad)
    out_ref[...] = (gathered * scale).astype(out_ref.dtype)


def _onehot_path(ids, table, n_pad, tile_m, scale, out_dtype, vmem_limit):
    v_pad, e_pad = table.shape
    return pl.pallas_call(
        functools.partial(_onehot_kernel, scale=scale),
        out_shape=jax.ShapeDtypeStruct((n_pad, e_pad), out_dtype),
        grid_spec=pltpu.PrefetchScalarGridSpec(
            num_scalar_prefetch=0,
            grid=(n_pad // tile_m,),
            in_specs=[
                pl.BlockSpec((tile_m, 1), lambda i: (i, 0)),       # ids tile
                # Invariant block index -> fetched once.
                # TODO(synk): pipeline_mode=pl.Buffered(1) would also halve the
                # table's double-buffer allocation; budgeted for 2x instead.
                pl.BlockSpec((v_pad, e_pad), lambda i: (0, 0)),
            ],
            out_specs=pl.BlockSpec((tile_m, e_pad), lambda i: (i, 0)),
        ),
        compiler_params=pltpu.CompilerParams(
            dimension_semantics=("parallel",),   # independent tiles: 2 TCs on v7x
            vmem_limit_bytes=vmem_limit,
        ),
    )(ids.reshape(n_pad, 1), table)


# --------------------------------------------------------------------------
# Path 2: mid vocab — VMEM-resident table, per-row dynamic-slice loop gather.
# --------------------------------------------------------------------------
def _loop_gather_kernel(ids_ref, table_ref, out_ref, *, tile_m, scale):
    # ids_ref:   SMEM (n_pad,) int32 (scalar prefetch)
    # table_ref: (V_pad, E_pad) VMEM-resident table
    # out_ref:   (TILE_M, E_pad)
    base = pl.program_id(0) * tile_m

    def body(chunk, carry):
        r0 = chunk * _GATHER_UNROLL
        for u in range(_GATHER_UNROLL):          # static -> unrolled row gathers
            r = r0 + u
            row = ids_ref[base + r]
            out_ref[pl.ds(r, 1), :] = (
                table_ref[pl.ds(row, 1), :] * scale
            ).astype(out_ref.dtype)
        return carry

    jax.lax.fori_loop(0, tile_m // _GATHER_UNROLL, body, 0)


def _loop_gather_path(ids, table, n_pad, tile_m, scale, out_dtype, vmem_limit):
    v_pad, e_pad = table.shape
    return pl.pallas_call(
        functools.partial(_loop_gather_kernel, tile_m=tile_m, scale=scale),
        out_shape=jax.ShapeDtypeStruct((n_pad, e_pad), out_dtype),
        grid_spec=pltpu.PrefetchScalarGridSpec(
            num_scalar_prefetch=1,                               # ids -> SMEM
            grid=(n_pad // tile_m,),
            in_specs=[pl.BlockSpec((v_pad, e_pad), lambda i, ids: (0, 0))],
            out_specs=pl.BlockSpec((tile_m, e_pad), lambda i, ids: (i, 0)),
        ),
        compiler_params=pltpu.CompilerParams(
            dimension_semantics=("parallel",),
            vmem_limit_bytes=vmem_limit,
        ),
    )(ids, table)


# --------------------------------------------------------------------------
# Path 3: huge vocab — table in HBM, double-buffered per-row DMA gather,
#         split across both TensorCores on v7x via a leading parallel axis.
# --------------------------------------------------------------------------
def _dma_gather_kernel(ids_ref, table_hbm, out_ref, buf, sems, *,
                       tile_m, tiles_per_core, scale):
    # ids_ref:   SMEM (n_pad,) int32 (scalar prefetch)
    # table_hbm: (V_pad, E_pad) ref left in HBM (memory_space=pl.ANY)
    # out_ref:   (TILE_M, E_pad) VMEM output block
    # buf:       VMEM (4, TILE_M, E_pad) = 2 cores x 2 slots of gather slabs
    # sems:      DMA semaphores, one per (core, slot)
    c = pl.program_id(0)            # "parallel": one value per TensorCore on v7x
    j = pl.program_id(1)            # "arbitrary": sequential double-buffer state
    tile = c * tiles_per_core + j
    slot = j % 2
    cslot = c * 2 + slot

    def issue(tile_idx, slot_idx):
        base = tile_idx * tile_m
        bslot = c * 2 + slot_idx

        def body(chunk, carry):
            r0 = chunk * _ISSUE_UNROLL
            for u in range(_ISSUE_UNROLL):   # static -> unrolled descriptor issue
                r = r0 + u
                row = ids_ref[base + r]
                pltpu.make_async_copy(
                    table_hbm.at[row], buf.at[bslot, r], sems.at[bslot]
                ).start()
            return carry

        jax.lax.fori_loop(0, tile_m // _ISSUE_UNROLL, body, 0)

    # Prime the pipeline with this core's first tile.
    @pl.when(j == 0)
    def _():
        issue(tile, slot)

    # Prefetch the next tile's rows into the other slot.
    @pl.when(j + 1 < tiles_per_core)
    def _():
        issue(tile + 1, 1 - slot)

    # ONE wait for the whole slab: DMA semaphores count bytes, so waiting on a
    # (TILE_M, E_pad) descriptor is equivalent to TILE_M per-row waits without
    # TILE_M blocking scalar stalls on the control path.
    pltpu.make_async_copy(buf.at[cslot], buf.at[cslot], sems.at[cslot]).wait()

    out_ref[...] = (buf[cslot] * scale).astype(out_ref.dtype)


def _dma_gather_path(ids, table, n_pad, tile_m, scale, out_dtype, vmem_limit):
    v_pad, e_pad = table.shape
    num_tiles = n_pad // tile_m
    assert num_tiles % 2 == 0
    tiles_per_core = num_tiles // 2
    return pl.pallas_call(
        functools.partial(_dma_gather_kernel, tile_m=tile_m,
                          tiles_per_core=tiles_per_core, scale=scale),
        out_shape=jax.ShapeDtypeStruct((n_pad, e_pad), out_dtype),
        grid_spec=pltpu.PrefetchScalarGridSpec(
            num_scalar_prefetch=1,                          # ids -> SMEM
            grid=(2, tiles_per_core),
            in_specs=[pl.BlockSpec(memory_space=pl.ANY)],   # table stays in HBM
            out_specs=pl.BlockSpec(
                (tile_m, e_pad),
                lambda c, j, ids: (c * tiles_per_core + j, 0)),
            scratch_shapes=[
                pltpu.VMEM((4, tile_m, e_pad), table.dtype),   # 2 cores x 2 slots
                pltpu.SemaphoreType.DMA((4,)),
            ],
        ),
        # Axis 0 "parallel": each v7x TensorCore owns half the tiles (and its own
        # buffer slots / semaphores).  Axis 1 "arbitrary": the manual double
        # buffer primes slot 0 at step 0 and prefetches tile j+1 at step j.
        compiler_params=pltpu.CompilerParams(
            dimension_semantics=("parallel", "arbitrary"),
            vmem_limit_bytes=vmem_limit,
        ),
    )(ids, table)


# --------------------------------------------------------------------------
# Wrapper (matches TokenEmbedding.forward: table[tokens] * sqrt(embed_size)).
# --------------------------------------------------------------------------
def _embed_chunk(ids, table, scale, out_dtype, mode, vmem_limit, default_tile_m):
    """ids: (n,) int32 already clamped to valid rows.  table: padded (V_pad, E_pad)."""
    n = ids.shape[0]
    v_pad, e_pad = table.shape
    itemsize = jnp.dtype(table.dtype).itemsize
    row_bytes = e_pad * itemsize
    table_bytes = v_pad * row_bytes

    # Resident-table budget: the invariant table block is fetched once but the
    # pipeline still allocates two buffers for it, so count it twice and leave
    # ~40% of the scoped limit for the output blocks / compiler scratch.
    resident_fits = 2 * table_bytes <= (vmem_limit * 6) // 10

    if mode == "auto":
        if resident_fits and v_pad <= _ONEHOT_MAX_VOCAB:
            mode = "onehot"    # tiny vocab: MXU one-hot gather
        elif resident_fits:
            mode = "loop"      # mid vocab: VMEM-resident per-row loop gather
        else:
            mode = "dma"       # huge vocab: HBM row gather via DMA

    if mode == "onehot":
        budget = max(vmem_limit - 2 * table_bytes, 8 * row_bytes) // 2
        per_row = 4 * row_bytes + 4 * v_pad + 4 * e_pad
        tile_m = _pick_tile(default_tile_m, n, per_row, budget)
        n_pad = _round_up(n, tile_m)
        ids_p = jnp.pad(ids, (0, n_pad - n))
        out = _onehot_path(ids_p, table, n_pad, tile_m, scale, out_dtype, vmem_limit)
    elif mode == "loop":
        budget = max(vmem_limit - 2 * table_bytes, 8 * row_bytes) // 2
        per_row = 2 * row_bytes
        tile_m = _pick_tile(default_tile_m, n, per_row, budget)
        n_pad = _round_up(n, tile_m)
        ids_p = jnp.pad(ids, (0, n_pad - n))
        out = _loop_gather_path(ids_p, table, n_pad, tile_m, scale, out_dtype,
                                vmem_limit)
    elif mode == "dma":
        budget = vmem_limit // 2
        per_row = 6 * row_bytes            # 4 gather slabs + double-buffered out
        tile_m = _pick_tile(default_tile_m, n, per_row, budget)
        n_pad = _round_up(n, 2 * tile_m)   # even #tiles: one half per TensorCore
        ids_p = jnp.pad(ids, (0, n_pad - n))
        out = _dma_gather_path(ids_p, table, n_pad, tile_m, scale, out_dtype,
                               vmem_limit)
    else:
        raise ValueError(f"unknown gather_mode: {mode!r}")
    return out[:n]


def token_embedding(tokens, emb_table, *, gather_mode="auto"):
    """tokens: (B, S) ints. emb_table: (V, E). Returns (B, S, E).

    gather_mode is "auto" (dispatch on table size) or one of
    {"onehot", "loop", "dma"} to force a path (tests / benchmarking).
    """
    b, s = tokens.shape
    v, e = emb_table.shape
    scale = math.sqrt(float(e))
    out_dtype = emb_table.dtype

    vmem_limit, default_tile_m = _tpu_vmem_config()

    # Pad the table to a lane/sublane-dense shape (padding is never selected).
    e_pad = _round_up(e, _LANE)
    v_pad = _round_up(v, _sublane_multiple(emb_table.dtype))
    table = emb_table
    if (v_pad, e_pad) != (v, e):
        table = jnp.pad(table, ((0, v_pad - v), (0, e_pad - e)))

    n = b * s
    # NOTE: out-of-range / negative ids are clamped to valid rows; PyTorch's
    # nn.Embedding would raise instead.  Padded tail slots are clamped to row 0
    # and sliced away below.
    flat = jnp.clip(tokens.reshape(n).astype(jnp.int32), 0, v - 1)

    # Chunk long token streams so scalar-prefetched ids stay well within SMEM.
    outs = []
    for start in range(0, n, _MAX_TOKENS_PER_CALL):
        chunk = flat[start:start + _MAX_TOKENS_PER_CALL]
        outs.append(_embed_chunk(chunk, table, scale, out_dtype, gather_mode,
                                 vmem_limit, default_tile_m))
    out = outs[0] if len(outs) == 1 else jnp.concatenate(outs, axis=0)
    return out[:, :e].reshape(b, s, e)


if __name__ == "__main__":
    vocab_size = 16
    embed_size = 32
    batch, seq = 2, 8

    key = jax.random.PRNGKey(0)
    k_emb, k_tok = jax.random.split(key)

    # Deterministic init (nn.Embedding ~ N(0,1)); zero the padding_idx row.
    emb_table = jax.random.normal(k_emb, (vocab_size, embed_size), jnp.float32)
    emb_table = emb_table.at[PAD_TOKEN].set(0.0)
    tokens = jax.random.randint(k_tok, (batch, seq), 0, vocab_size, jnp.int32)

    ref = emb_table[tokens] * math.sqrt(float(embed_size))

    # Auto dispatch (tiny vocab -> VMEM-resident one-hot MXU gather).
    out = jax.block_until_ready(token_embedding(tokens, emb_table))
    assert out.shape == (batch, seq, embed_size)
    assert jnp.allclose(out, ref, atol=1e-5, rtol=1e-5), "onehot path mismatch"

    # Mid-vocab path: VMEM-resident table + per-row loop gather (forced here so
    # every code path is exercised and checked).
    out_loop = jax.block_until_ready(
        token_embedding(tokens, emb_table, gather_mode="loop"))
    assert jnp.allclose(out_loop, ref, atol=1e-5, rtol=1e-5), "loop path mismatch"

    # Huge-vocab path: HBM table + double-buffered per-row DMA gather.
    out_dma = jax.block_until_ready(
        token_embedding(tokens, emb_table, gather_mode="dma"))
    assert jnp.allclose(out_dma, ref, atol=1e-5, rtol=1e-5), "dma path mismatch"

    print("KERNEL_OK")
</pallas_src>

<mosaic_0001>
module attributes {stable_mosaic.version = 11 : i64} {
  func.func @_onehot_kernel(%arg0: i32, %arg1: memref<16x1xi32, #tpu.memory_space<vmem>>, %arg2: memref<16x128xf32, #tpu.memory_space<vmem>>, %arg3: memref<16x128xf32, #tpu.memory_space<vmem>>) attributes {dimension_semantics = [#tpu.dimension_semantics<parallel>], iteration_bounds = array<i64: 1>, scalar_prefetch = 0 : i64, scratch_operands = 0 : i64, tpu.core_type = #tpu.core_type<tc>, window_params = [{transform_indices = @transform_0, window_bounds = array<i64: 16, 1>}, {pipeline_mode = #tpu.pipeline_mode<synchronous>, transform_indices = @transform_1, window_bounds = array<i64: 16, 128>}, {transform_indices = @transform_2, window_bounds = array<i64: 16, 128>}]} {
    %c0 = arith.constant 0 : index
    %c0_0 = arith.constant 0 : index
    %0 = vector.load %arg1[%c0, %c0_0] : memref<16x1xi32, #tpu.memory_space<vmem>>, vector<16x1xi32>
    %1 = tpu.iota {dimensions = array<i32: 1>} : vector<16x16xi32>
    %2 = vector.broadcast %0 : vector<16x1xi32> to vector<16x16xi32>
    %3 = arith.cmpi eq, %1, %2 : vector<16x16xi32>
    %4 = arith.extui %3 : vector<16x16xi1> to vector<16x16xi32>
    %5 = arith.sitofp %4 : vector<16x16xi32> to vector<16x16xf32>
    %c0_1 = arith.constant 0 : index
    %c0_2 = arith.constant 0 : index
    %6 = vector.load %arg2[%c0_1, %c0_2] : memref<16x128xf32, #tpu.memory_space<vmem>>, vector<16x128xf32>
    %cst = arith.constant dense<0.000000e+00> : vector<16x128xf32>
    %7 = tpu.matmul %5, %6, %cst {dimension_numbers = #tpu.dot_dimension_numbers<[1], [0], [0], [1], [0, 0, 1, 1], [], []>} : vector<16x16xf32>, vector<16x128xf32>, vector<16x128xf32> -> vector<16x128xf32>
    %cst_3 = arith.constant 5.65685415 : f32
    %8 = vector.broadcast %cst_3 : f32 to vector<16x128xf32>
    %9 = arith.mulf %7, %8 : vector<16x128xf32>
    %c0_4 = arith.constant 0 : index
    %c0_5 = arith.constant 0 : index
    %10 = vector.load %arg3[%c0_4, %c0_5] : memref<16x128xf32, #tpu.memory_space<vmem>>, vector<16x128xf32>
    tpu.vector_store %arg3[%c0_4, %c0_5], %9 {strides = array<i32>} : memref<16x128xf32, #tpu.memory_space<vmem>>, vector<16x128xf32>,
    return
  }
  func.func @transform_0(%arg0: i32) -> (i32, i32) {
    %c0_i32 = arith.constant 0 : i32
    %c0_i32_0 = arith.constant 0 : i32
    return %arg0, %c0_i32 : i32, i32
  }
  func.func @transform_1(%arg0: i32) -> (i32, i32) {
    %c0_i32 = arith.constant 0 : i32
    %c0_i32_0 = arith.constant 0 : i32
    %c0_i32_1 = arith.constant 0 : i32
    return %c0_i32, %c0_i32_0 : i32, i32
  }
  func.func @transform_2(%arg0: i32) -> (i32, i32) {
    %c0_i32 = arith.constant 0 : i32
    %c0_i32_0 = arith.constant 0 : i32
    return %arg0, %c0_i32 : i32, i32
  }
}

</mosaic_0001>

<llo_original>
// kernel: tpu_custom_call.1
$region0: #{tpu_custom_call.1}
  #allocation0 [shape = 'u32[]', space=smem, size = 0x4, offset = 0x4, fixed_abs, tag = 'smem constant byte address 0x4 - core index']
  #allocation1 [shape = 'u32[144,128]{1,0:T(1,128)}', space=vmem, size = 0x12000, scoped, tag = 'internal scratch']
  %s0 = inlined_call_operand.vmem [shape: s32[16,1], index: 0, kind: input, shape index: {}]
  %s1 = inlined_call_operand.vmem [shape: f32[16,128], index: 1, kind: input, shape index: {}]
  %s2 = inlined_call_operand.hbm [shape: f32[16,128], index: 2, kind: output, shape index: {}]
  %s3 = sld [smem:[#allocation0]]
  $region18: #{tpu_custom_call.1} parent=0
    _
  %s5 = ssub.s32 1, %s3
  %s6 = scalar_select 0, %s5, %s3
  $region1: #{tpu_custom_call.1} parent=0
    #allocation2 [shape = 'u8[8192]{0}', space=vmem, size = 0x2000, scoped, tag = 'output window, operand 0, single buffered']
    #allocation3 [shape = 's32[1]{0}', space=sflag, size = 0x4, scoped, tag = 'scoped memory for tpu_custom_call.1']
    %7 = vsyncpa [#allocation3], 0
    // Predicated region
    $region2: #{tpu_custom_call.1} parent=1 // pred_check
      _
    $region3: #{tpu_custom_call.1} parent=1 // pred_check_branch
      %9 = sbr.rel (0) target = $region5
    $region4: #{tpu_custom_call.1} parent=1 // pred_region
      _
    $region5: #{tpu_custom_call.1} parent=1 // pred_fallthru
      _
    // Predicated region
    $region6: #{tpu_custom_call.1} parent=1 // pred_check
      _
    $region7: #{tpu_custom_call.1} parent=1 // pred_check_branch
      %11 = sbr.rel (0) target = $region9
    $region8: #{tpu_custom_call.1} parent=1 // pred_region
      _
    $region9: #{tpu_custom_call.1} parent=1 // pred_fallthru
      _
    %v12 = vld [vmem:[%s0] sm:$0xff]
    %v13 = vld [vmem:[%s0 + $0x8] sm:$0xff]
    %v14 = vlaneseq
    %v15 = vand.u32 %v14, 127
    %16 = vset.pattern.permute.xlu0 0
    %17 = vperm.xlu0 %16, %v12
    %v18 = vpop.permute.xlu0 %17
    %19 = vset.pattern.permute.xlu0 0
    %20 = vperm.xlu0 %19, %v13
    %v21 = vpop.permute.xlu0 %20
    %vm22 = vcmp.eq.s32.totalorder %v15, %v18
    %vm23 = vcmp.eq.s32.totalorder %v15, %v21
    %v24 = vsel %vm22, 1, 0
    %v25 = vsel %vm23, 1, 0
    %v26 = vcvt.s32.f32 %v24
    %v27 = vcvt.s32.f32 %v25
    %v28 = vld [vmem:[%s1] sm:$0xff]
    %v29 = vld [vmem:[%s1 + $0x8] sm:$0xff]
    %vm30 = vcmask 130048
    %v32 = vsel %vm30, %v26, 0
    %v35 = vsel %vm30, %v27, 0
    %37 = vmatprep.subr.mxu0 0.0
    %38 = vmatpush1.msra.mxu0 0.0
    %39 = vmatprep.subr.mxu0 0.0
    %40 = vmatpush1.msra.mxu0 0.0
    %41 = vmatprep.subr.mxu0 0.0
    %42 = vmatpush1.msra.mxu0 0.0
    %43 = vmatprep.subr.mxu0 0.0
    %44 = vmatpush1.msra.mxu0 0.0
    %45 = vmatprep.subr.mxu0 0.0
    %46 = vmatpush1.msra.mxu0 0.0
    %47 = vmatprep.subr.mxu0 0.0
    %48 = vmatpush1.msra.mxu0 0.0
    %49 = vmatprep.subr.mxu0 0.0
    %50 = vmatpush1.msra.mxu0 0.0
    %51 = vmatprep.subr.mxu0 0.0
    %52 = vmatpush1.msra.mxu0 0.0
    %53 = vmatprep.subr.mxu0 0.0
    %54 = vmatpush1.msra.mxu0 0.0
    %55 = vmatprep.subr.mxu0 0.0
    %56 = vmatpush1.msra.mxu0 0.0
    %57 = vmatprep.subr.mxu0 0.0
    %58 = vmatpush1.msra.mxu0 0.0
    %59 = vmatprep.subr.mxu0 0.0
    %60 = vmatpush1.msra.mxu0 0.0
    %61 = vmatprep.subr.mxu0 0.0
    %62 = vmatpush1.msra.mxu0 0.0
    %63 = vmatprep.subr.mxu0 0.0
    %64 = vmatpush1.msra.mxu0 0.0
    %65 = vmatprep.subr.mxu0 0.0
    %66 = vmatpush1.msra.mxu0 %v29
    %67 = vmatprep.subr.mxu0 0.0
    %68 = vmatpush1.msra.mxu0 %v28
    %69 = vmatprep.subr.mxu0 0.0
    %70 = vmatpush2.msra.mxu0 0.0
    %71 = vmatprep.subr.mxu0 0.0
    %72 = vmatpush2.msra.mxu0 0.0
    %73 = vmatprep.subr.mxu0 0.0
    %74 = vmatpush2.msra.mxu0 0.0
    %75 = vmatprep.subr.mxu0 0.0
    %76 = vmatpush2.msra.mxu0 0.0
    %77 = vmatprep.subr.mxu0 0.0
    %78 = vmatpush2.msra.mxu0 0.0
    %79 = vmatprep.subr.mxu0 0.0
    %80 = vmatpush2.msra.mxu0 0.0
    %81 = vmatprep.subr.mxu0 0.0
    %82 = vmatpush2.msra.mxu0 0.0
    %83 = vmatprep.subr.mxu0 0.0
    %84 = vmatpush2.msra.mxu0 0.0
    %85 = vmatprep.subr.mxu0 0.0
    %86 = vmatpush2.msra.mxu0 0.0
    %87 = vmatprep.subr.mxu0 0.0
    %88 = vmatpush2.msra.mxu0 0.0
    %89 = vmatprep.subr.mxu0 0.0
    %90 = vmatpush2.msra.mxu0 0.0
    %91 = vmatprep.subr.mxu0 0.0
    %92 = vmatpush2.msra.mxu0 0.0
    %93 = vmatprep.subr.mxu0 0.0
    %94 = vmatpush2.msra.mxu0 0.0
    %95 = vmatprep.subr.mxu0 0.0
    %96 = vmatpush2.msra.mxu0 0.0
    %97 = vmatprep.subr.mxu0 0.0
    %98 = vmatpush2.msra.mxu0 0.0
    %99 = vmatprep.subr.mxu0 0.0
    %100 = vmatpush2.msra.mxu0 0.0
    %101 = vmatprep.mubr.f32.mxu0 0.0
    %102 = vmatmul.mubr.f32.gmra.mxu0 %v32
    %v103 = vpop.f32.mrf.mxu0
    %v104 = vadd.f32 0.0, %v103
    %v105 = vpop.f32.mrf.mxu0
    %106 = vmatprep.mubr.f32.mxu0 0.0
    %107 = vmatmul.mubr.f32.gmra.mxu0 %v35
    %v108 = vpop.f32.mrf.mxu0
    %v109 = vadd.f32 0.0, %v108
    %v110 = vpop.f32.mrf.mxu0
    %111 = vdwg.mxu0
    %v112 = vmul.f32 %v104, 5.656854
    %v113 = vmul.f32 %v109, 5.656854
    %114 = vst [vmem:[#allocation2] sm:$0xff] %v112
    %115 = vst [vmem:[#allocation2 + $0x8] sm:$0xff] %v113
    // Predicated region
    $region10: #{tpu_custom_call.1} parent=1 // pred_check
      _
    $region11: #{tpu_custom_call.1} parent=1 // pred_check_branch
      %117 = sbr.rel (0) target = $region13
    $region12: #{tpu_custom_call.1} parent=1 // pred_region
      %s119 = ssub.s32 256, 256
      %120 = vsyncadd [#allocation3], %s119
      %s121 = sshll.u32 [#allocation2], 4
      %s122 = int_to_ptr.vmem [resolvable:$true] %s121
      %127 = dma.vmem_to_hbm [thread:$0]  %s122, 256, %s2, [#allocation3], 128, 128, 8
    $region13: #{tpu_custom_call.1} parent=1 // pred_fallthru
      _
    // Predicated region
    $region14: #{tpu_custom_call.1} parent=1 // pred_check
      _
    $region15: #{tpu_custom_call.1} parent=1 // pred_check_branch
      %129 = sbr.rel (0) target = $region17
    $region16: #{tpu_custom_call.1} parent=1 // pred_region
      %130 = dma.done [#allocation3], 256
    $region17: #{tpu_custom_call.1} parent=1 // pred_fallthru
      _
    %131 = vsyncpa [#allocation3], 1

</llo_original>
